<compile_context>
chip_gen: v7x
topology: tpu7x:2x2x1
jax: 0.10.0
libtpu: 0.0.40
codegen_flags: <defaults>
</compile_context>

<pallas_src>
import functools

import jax
import jax.numpy as jnp
import numpy as np
from jax import lax
from jax.experimental import pallas as pl
from jax.experimental.pallas import tpu as pltpu

_LANE = 128


def _round_up(x, m):
    return -(-x // m) * m


def _vmem_capacity():
    try:
        return int(pltpu.get_tpu_info().vmem_capacity_bytes)
    except Exception:
        return 64 << 20          # conservative (v7x physical VMEM)


# ----------------------------------------------------------------------------
# Pallas kernel
# ----------------------------------------------------------------------------
def _trilerp_kernel(lut_ref, x_ref, o_ref, *, dim, dpad):
    """lut_ref: (1, 3*dpad, dpad^2)   x_ref: (1, 3, TP)   o_ref: (1, 1, 3, TP)."""
    tp = x_ref.shape[-1]
    inv_binsize = (dim - 1) / 1.000001          # 1 / binsize (Python float)

    # r, g, b for this pixel tile, each (1, TP) with pixels on the lane axis.
    r = x_ref[:, 0, :].astype(jnp.float32)
    g = x_ref[:, 1, :].astype(jnp.float32)
    b = x_ref[:, 2, :].astype(jnp.float32)
    r_s = r * inv_binsize                       # scaled coords in [0, dim-1)
    g_s = g * inv_binsize
    b_s = b * inv_binsize

    # 2-hot "hat" weights per colour axis, shape (dpad, TP):
    #   row k gets max(0, 1 - |k - s|)  ==  the linear-interp weight of node k.
    # Nodes k >= dim (the padding) always get exactly 0 since s < dim - 1.
    k = lax.broadcasted_iota(jnp.int32, (dpad, tp), 0).astype(jnp.float32)
    wr = jnp.maximum(1.0 - jnp.abs(k - r_s), 0.0)
    wg = jnp.maximum(1.0 - jnp.abs(k - g_s), 0.0)
    wb = jnp.maximum(1.0 - jnp.abs(k - b_s), 0.0)

    # Outer product over the (green, red) plane -> 4-hot (dpad^2, TP) weights.
    # dpad is a multiple of 8, so the merge reshape is sublane-aligned.
    wgr = (wg[:, None, :] * wr[None, :, :]).reshape(dpad * dpad, tp)

    # MXU: one matmul contracts the (g, r) plane for every (channel, blue) row.
    lut2d = lut_ref[0].astype(jnp.float32)      # (3*dpad, dpad^2)
    t = jnp.dot(lut2d, wgr,
                precision=lax.Precision.HIGHEST,
                preferred_element_type=jnp.float32)          # (3*dpad, TP)

    # VPU/XLU: 2-hot linear-interp reduce over the blue axis (aligned split).
    t3 = t.reshape(3, dpad, tp)
    out = jnp.sum(t3 * wb[None, :, :], axis=1)               # (3, TP)

    o_ref[...] = out.reshape(o_ref.shape).astype(o_ref.dtype)


# ----------------------------------------------------------------------------
# Wrapper (glue in plain JAX)
# ----------------------------------------------------------------------------
def _choose_tp(dpad, num_pixels, n_parallel):
    """Pixel tile size (lane axis), multiple of 128, sized per generation."""
    # f32 temporaries per pixel column: ~2*(dpad^2) (outer product + wgr)
    # + wr/wg/wb + t + io slack.
    per_col = 4 * (2 * dpad * dpad + 8 * dpad + 16)
    budget = min(_vmem_capacity() // 4, 20 << 20)   # v7x -> 16 MiB, v5e/v6e -> 20 MiB
    cap = max(_LANE, budget // per_col // _LANE * _LANE)
    tp_max = 4096 if dpad <= 16 else 1536           # small dim is step-overhead bound
    tp = max(_LANE, min(tp_max, cap))
    p_ceil = _round_up(num_pixels, _LANE)
    tp = min(tp, p_ceil)
    # v7x megacore: keep >= 2 parallel grid steps when a single image would
    # otherwise collapse into one tile.
    if n_parallel == 1 and p_ceil >= 2 * _LANE:
        tp = min(tp, _round_up(p_ceil // 2, _LANE))
    return tp


def trilinear_interpolation(lut, x):
    """Mirrors TrilinearInterpolation.forward.

    lut: (M, 3, dim, dim, dim), x: (B, 3, H, W).
      M == 1          -> (B, 3, H, W)
      M == B (M > 1)  -> (B, 3, H, W), per-sample LUT
      otherwise       -> (B, M, 3, H, W)
    """
    # TODO(synk): only the forward pass is implemented (no custom backward /
    # ctx.save_for_backward equivalent of TrilinearInterpolationFunction).
    M = lut.shape[0]
    B, C, H, W = x.shape
    assert C == 3, "trilinear LUT interpolation expects 3 channels (RGB)"
    dim = lut.shape[-1]
    dpad = _round_up(dim, 8)
    P = H * W

    per_sample = (M == B and M > 1)
    broadcast = (M > 1 and not per_sample)
    G = M if broadcast else 1

    TP = _choose_tp(dpad, P, G * B)
    P_pad = _round_up(P, TP)

    # Zero-pad the LUT node axes to dpad (padded nodes always get weight 0).
    if dpad != dim:
        lut = jnp.pad(lut, ((0, 0), (0, 0),
                            (0, dpad - dim), (0, dpad - dim), (0, dpad - dim)))
    # (M, 3*dpad, dpad^2): rows = (channel, blue), cols = (green, red)
    # -> matches the CUDA flat index  b*dim^2 + g*dim + r  (on the padded grid).
    lut2d = lut.reshape(M, 3 * dpad, dpad * dpad)

    x_flat = x.reshape(B, 3, P)
    if P_pad != P:
        x_flat = jnp.pad(x_flat, ((0, 0), (0, 0), (0, P_pad - P)))

    if broadcast:
        lut_idx = lambda m, b, t: (m, 0, 0)
    elif per_sample:
        lut_idx = lambda m, b, t: (b, 0, 0)
    else:
        lut_idx = lambda m, b, t: (0, 0, 0)      # grid-invariant: DMA'd once

    # Explicit VMEM limit (v5e scoped default is only 16 MiB; keep v7x under
    # its 64 MiB physical VMEM).
    per_col = 4 * (2 * dpad * dpad + 8 * dpad + 16)
    lut_block = 3 * dpad * dpad * dpad * 4
    need = 2 * (lut_block + 2 * 3 * TP * 4) + per_col * TP
    vmem_limit = max(16 << 20, min(int(1.5 * need) + (2 << 20), 40 << 20))

    flops = 2 * 3 * (dpad ** 3) * P_pad * G * B
    bytes_acc = (G * B * 3 * P_pad * 4) * 2 + M * 3 * (dpad ** 3) * 4

    out = pl.pallas_call(
        functools.partial(_trilerp_kernel, dim=dim, dpad=dpad),
        out_shape=jax.ShapeDtypeStruct((B, G, 3, P_pad), x.dtype),
        grid_spec=pltpu.PrefetchScalarGridSpec(
            num_scalar_prefetch=0,
            grid=(G, B, P_pad // TP),
            in_specs=[
                pl.BlockSpec((1, 3 * dpad, dpad * dpad), lut_idx),
                pl.BlockSpec((1, 3, TP), lambda m, b, t: (b, 0, t)),
            ],
            # Output laid out as (B, G, 3, P): the broadcast-LUT result comes
            # out directly as (B, M, 3, H, W) — no wrapper transpose.
            out_specs=pl.BlockSpec((1, 1, 3, TP), lambda m, b, t: (b, m, 0, t)),
        ),
        compiler_params=pltpu.CompilerParams(
            dimension_semantics=("parallel", "parallel", "parallel"),
            vmem_limit_bytes=vmem_limit),
        cost_estimate=pl.CostEstimate(
            flops=flops, transcendentals=0, bytes_accessed=bytes_acc),
    )(lut2d, x_flat)

    out = out[..., :P].reshape(B, G, 3, H, W)
    if broadcast:
        return out                               # (B, M, 3, H, W)
    return out[:, 0]                             # (B, 3, H, W)


# ----------------------------------------------------------------------------
# Pure-JAX reference (faithful translation of the CUDA op, for checking)
# ----------------------------------------------------------------------------
def _ref_apply_one(lut1, img, dim):
    binsize = 1.000001 / (dim - 1)
    lut_flat = lut1.reshape(3, dim ** 3)
    r, g, b = img[0], img[1], img[2]
    r_id = jnp.floor(r / binsize)
    g_id = jnp.floor(g / binsize)
    b_id = jnp.floor(b / binsize)
    r_d = (r - r_id * binsize) / binsize
    g_d = (g - g_id * binsize) / binsize
    b_d = (b - b_id * binsize) / binsize
    id000 = (r_id + g_id * dim + b_id * dim * dim).astype(jnp.int32)
    corners = (
        (0, (1 - r_d) * (1 - g_d) * (1 - b_d)),
        (1, r_d * (1 - g_d) * (1 - b_d)),
        (dim, (1 - r_d) * g_d * (1 - b_d)),
        (dim + 1, r_d * g_d * (1 - b_d)),
        (dim * dim, (1 - r_d) * (1 - g_d) * b_d),
        (dim * dim + 1, r_d * (1 - g_d) * b_d),
        (dim * dim + dim, (1 - r_d) * g_d * b_d),
        (dim * dim + dim + 1, r_d * g_d * b_d),
    )
    out = jnp.zeros((3,) + r.shape, jnp.float32)
    for off, w in corners:
        out = out + w[None] * lut_flat[:, id000 + off]
    return out


def _ref_single_lut(lut, x):
    dim = lut.shape[-1]
    return jnp.stack(
        [_ref_apply_one(lut[0], x[i], dim) for i in range(x.shape[0])], axis=0)


# ----------------------------------------------------------------------------
if __name__ == "__main__":
    key = jax.random.PRNGKey(0)
    k1, k2, k3, k4 = jax.random.split(key, 4)

    dim = 8
    batch, channels, H, W = 2, 3, 16, 16
    x = jax.random.uniform(k2, (batch, channels, H, W), dtype=jnp.float32)

    # Case 1: single LUT shared across the batch -> (B, 3, H, W)
    lut1 = jax.random.normal(k1, (1, 3, dim, dim, dim), dtype=jnp.float32)
    out1 = jax.block_until_ready(trilinear_interpolation(lut1, x))
    ref1 = _ref_single_lut(lut1, x)
    assert out1.shape == (batch, channels, H, W)
    np.testing.assert_allclose(np.asarray(out1), np.asarray(ref1),
                               rtol=1e-5, atol=1e-5)

    # Case 2: per-sample LUTs (M == B) -> (B, 3, H, W)
    lut2 = jax.random.normal(k3, (batch, 3, dim, dim, dim), dtype=jnp.float32)
    out2 = jax.block_until_ready(trilinear_interpolation(lut2, x))
    ref2 = jnp.stack(
        [_ref_apply_one(lut2[i], x[i], dim) for i in range(batch)], axis=0)
    np.testing.assert_allclose(np.asarray(out2), np.asarray(ref2),
                               rtol=1e-5, atol=1e-5)

    # Case 3: bank of M LUTs broadcast over the batch -> (B, M, 3, H, W)
    M = 3
    lut3 = jax.random.normal(k4, (M, 3, dim, dim, dim), dtype=jnp.float32)
    out3 = jax.block_until_ready(trilinear_interpolation(lut3, x))
    ref3 = jnp.stack(
        [jnp.stack([_ref_apply_one(lut3[m], x[i], dim) for m in range(M)], 0)
         for i in range(batch)], axis=0)
    assert out3.shape == (batch, M, channels, H, W)
    np.testing.assert_allclose(np.asarray(out3), np.asarray(ref3),
                               rtol=1e-5, atol=1e-5)

    # Case 4: non-multiple-of-128 pixel count exercises the padding path.
    x_odd = jax.random.uniform(k2, (batch, channels, 10, 12), dtype=jnp.float32)
    out4 = jax.block_until_ready(trilinear_interpolation(lut1, x_odd))
    ref4 = _ref_single_lut(lut1, x_odd)
    np.testing.assert_allclose(np.asarray(out4), np.asarray(ref4),
                               rtol=1e-5, atol=1e-5)

    print("KERNEL_OK")
</pallas_src>

<mosaic_0001>
module attributes {stable_mosaic.version = 11 : i64} {
  func.func @_trilerp_kernel(%arg0: i32, %arg1: i32, %arg2: i32, %arg3: memref<1x24x64xf32, #tpu.memory_space<vmem>>, %arg4: memref<1x3x256xf32, #tpu.memory_space<vmem>>, %arg5: memref<1x1x3x256xf32, #tpu.memory_space<vmem>>) attributes {dimension_semantics = [#tpu.dimension_semantics<parallel>, #tpu.dimension_semantics<parallel>, #tpu.dimension_semantics<parallel>], iteration_bounds = array<i64: 1, 2, 1>, scalar_prefetch = 0 : i64, scratch_operands = 0 : i64, tpu.core_type = #tpu.core_type<tc>, window_params = [{pipeline_mode = #tpu.pipeline_mode<synchronous>, transform_indices = @transform_0, window_bounds = array<i64: 1, 24, 64>}, {transform_indices = @transform_1, window_bounds = array<i64: 1, 3, 256>}, {transform_indices = @transform_2, window_bounds = array<i64: 1, 1, 3, 256>}]} {
    %c0 = arith.constant 0 : index
    %c0_0 = arith.constant 0 : index
    %c0_1 = arith.constant 0 : index
    %0 = vector.load %arg4[%c0, %c0_0, %c0_1] : memref<1x3x256xf32, #tpu.memory_space<vmem>>, vector<1x1x256xf32>
    %1 = vector.shape_cast %0 : vector<1x1x256xf32> to vector<1x256xf32>
    %c0_2 = arith.constant 0 : index
    %c1 = arith.constant 1 : index
    %c0_3 = arith.constant 0 : index
    %2 = vector.load %arg4[%c0_2, %c1, %c0_3] : memref<1x3x256xf32, #tpu.memory_space<vmem>>, vector<1x1x256xf32>
    %3 = vector.shape_cast %2 : vector<1x1x256xf32> to vector<1x256xf32>
    %c0_4 = arith.constant 0 : index
    %c2 = arith.constant 2 : index
    %c0_5 = arith.constant 0 : index
    %4 = vector.load %arg4[%c0_4, %c2, %c0_5] : memref<1x3x256xf32, #tpu.memory_space<vmem>>, vector<1x1x256xf32>
    %5 = vector.shape_cast %4 : vector<1x1x256xf32> to vector<1x256xf32>
    %cst = arith.constant 6.99999285 : f32
    %6 = vector.broadcast %cst : f32 to vector<1x256xf32>
    %7 = arith.mulf %1, %6 : vector<1x256xf32>
    %cst_6 = arith.constant 6.99999285 : f32
    %8 = vector.broadcast %cst_6 : f32 to vector<1x256xf32>
    %9 = arith.mulf %3, %8 : vector<1x256xf32>
    %cst_7 = arith.constant 6.99999285 : f32
    %10 = vector.broadcast %cst_7 : f32 to vector<1x256xf32>
    %11 = arith.mulf %5, %10 : vector<1x256xf32>
    %12 = tpu.iota {dimensions = array<i32: 0>} : vector<8x256xi32>
    %13 = arith.sitofp %12 : vector<8x256xi32> to vector<8x256xf32>
    %14 = vector.broadcast %7 : vector<1x256xf32> to vector<8x256xf32>
    %15 = arith.subf %13, %14 : vector<8x256xf32>
    %16 = math.absf %15 : vector<8x256xf32>
    %cst_8 = arith.constant 1.000000e+00 : f32
    %17 = vector.broadcast %cst_8 : f32 to vector<8x256xf32>
    %18 = arith.subf %17, %16 : vector<8x256xf32>
    %cst_9 = arith.constant 0.000000e+00 : f32
    %19 = vector.broadcast %cst_9 : f32 to vector<8x256xf32>
    %20 = arith.maximumf %18, %19 : vector<8x256xf32>
    %21 = vector.broadcast %9 : vector<1x256xf32> to vector<8x256xf32>
    %22 = arith.subf %13, %21 : vector<8x256xf32>
    %23 = math.absf %22 : vector<8x256xf32>
    %cst_10 = arith.constant 1.000000e+00 : f32
    %24 = vector.broadcast %cst_10 : f32 to vector<8x256xf32>
    %25 = arith.subf %24, %23 : vector<8x256xf32>
    %cst_11 = arith.constant 0.000000e+00 : f32
    %26 = vector.broadcast %cst_11 : f32 to vector<8x256xf32>
    %27 = arith.maximumf %25, %26 : vector<8x256xf32>
    %28 = vector.broadcast %11 : vector<1x256xf32> to vector<8x256xf32>
    %29 = arith.subf %13, %28 : vector<8x256xf32>
    %30 = math.absf %29 : vector<8x256xf32>
    %cst_12 = arith.constant 1.000000e+00 : f32
    %31 = vector.broadcast %cst_12 : f32 to vector<8x256xf32>
    %32 = arith.subf %31, %30 : vector<8x256xf32>
    %cst_13 = arith.constant 0.000000e+00 : f32
    %33 = vector.broadcast %cst_13 : f32 to vector<8x256xf32>
    %34 = arith.maximumf %32, %33 : vector<8x256xf32>
    %35 = vector.shape_cast %27 : vector<8x256xf32> to vector<8x1x256xf32>
    %36 = vector.shape_cast %20 : vector<8x256xf32> to vector<1x8x256xf32>
    %37 = vector.broadcast %35 : vector<8x1x256xf32> to vector<8x8x256xf32>
    %38 = vector.broadcast %36 : vector<1x8x256xf32> to vector<8x8x256xf32>
    %39 = arith.mulf %37, %38 : vector<8x8x256xf32>
    %40 = vector.shape_cast %39 : vector<8x8x256xf32> to vector<64x256xf32>
    %c0_14 = arith.constant 0 : index
    %c0_15 = arith.constant 0 : index
    %c0_16 = arith.constant 0 : index
    %41 = vector.load %arg3[%c0_14, %c0_15, %c0_16] : memref<1x24x64xf32, #tpu.memory_space<vmem>>, vector<1x24x64xf32>
    %42 = vector.shape_cast %41 : vector<1x24x64xf32> to vector<24x64xf32>
    %cst_17 = arith.constant dense<0.000000e+00> : vector<24x256xf32>
    %43 = tpu.matmul %42, %40, %cst_17 {dimension_numbers = #tpu.dot_dimension_numbers<[1], [0], [0], [1], [0, 0, 1, 1], [], []>, precision = #tpu.contract_precision<fp32>} : vector<24x64xf32>, vector<64x256xf32>, vector<24x256xf32> -> vector<24x256xf32>
    %44 = vector.shape_cast %43 : vector<24x256xf32> to vector<3x8x256xf32>
    %45 = vector.shape_cast %34 : vector<8x256xf32> to vector<1x8x256xf32>
    %46 = vector.broadcast %45 : vector<1x8x256xf32> to vector<3x8x256xf32>
    %47 = arith.mulf %44, %46 : vector<3x8x256xf32>
    %cst_18 = arith.constant dense<0.000000e+00> : vector<3x256xf32>
    %48 = vector.multi_reduction <add>, %47, %cst_18 [1] : vector<3x8x256xf32> to vector<3x256xf32>
    %49 = vector.shape_cast %48 : vector<3x256xf32> to vector<1x1x3x256xf32>
    %c0_19 = arith.constant 0 : index
    %c0_20 = arith.constant 0 : index
    %c0_21 = arith.constant 0 : index
    %c0_22 = arith.constant 0 : index
    %50 = vector.load %arg5[%c0_19, %c0_20, %c0_21, %c0_22] : memref<1x1x3x256xf32, #tpu.memory_space<vmem>>, vector<1x1x3x256xf32>
    tpu.vector_store %arg5[%c0_19, %c0_20, %c0_21, %c0_22], %49 {strides = array<i32>} : memref<1x1x3x256xf32, #tpu.memory_space<vmem>>, vector<1x1x3x256xf32>,
    return
  }
  func.func @transform_0(%arg0: i32, %arg1: i32, %arg2: i32) -> (i32, i32, i32) {
    %c0_i32 = arith.constant 0 : i32
    %c0_i32_0 = arith.constant 0 : i32
    %c0_i32_1 = arith.constant 0 : i32
    %c0_i32_2 = arith.constant 0 : i32
    return %c0_i32, %c0_i32_0, %c0_i32_1 : i32, i32, i32
  }
  func.func @transform_1(%arg0: i32, %arg1: i32, %arg2: i32) -> (i32, i32, i32) {
    %c0_i32 = arith.constant 0 : i32
    %c0_i32_0 = arith.constant 0 : i32
    return %arg1, %c0_i32, %arg2 : i32, i32, i32
  }
  func.func @transform_2(%arg0: i32, %arg1: i32, %arg2: i32) -> (i32, i32, i32, i32) {
    %c0_i32 = arith.constant 0 : i32
    %c0_i32_0 = arith.constant 0 : i32
    return %arg1, %arg0, %c0_i32, %arg2 : i32, i32, i32, i32
  }
}

</mosaic_0001>

<llo_original>
// kernel: tpu_custom_call.1
$region0: #{tpu_custom_call.1}
  #allocation0 [shape = 'u32[]', space=smem, size = 0x4, offset = 0x4, fixed_abs, tag = 'smem constant byte address 0x4 - core index']
  #allocation1 [shape = 'u32[144,128]{1,0:T(1,128)}', space=vmem, size = 0x12000, scoped, tag = 'internal scratch']
  %s0 = inlined_call_operand.vmem [shape: f32[1,24,64], index: 0, kind: input, shape index: {}]
  %s1 = inlined_call_operand.vmem [shape: f32[2,3,256], index: 1, kind: input, shape index: {}]
  %s2 = inlined_call_operand.vmem [shape: f32[2,1,3,256], index: 2, kind: output, shape index: {}]
  %s3 = sld [smem:[#allocation0]]
  $region41: #{tpu_custom_call.1} parent=0
    _
  %s5 = ssub.s32 1, %s3
  %s6 = scalar_select 0, %s5, %s3
  loop: start=0, step=1, limit=4
  $region2: #{tpu_custom_call.1} parent=0 // loop_pre_header
    _
  $region3: #{tpu_custom_call.1} parent=0 // loop_header
    %s8 = sphi 0, %s12
    %p9 = scmp.ge.s32.totalorder %s8, 4
    %s15 = sphi 0, %s34
    %s16 = sphi 0, %s30
    %s17 = sphi 0, %s26
    %s18 = sphi 0, %s15
    %s19 = sphi 0, %s16
    %s20 = sphi 0, %s17
    %s21 = sphi 0, %s18
    %s22 = sphi 0, %s19
    %s23 = sphi 0, %s20
    %s35 = sphi 0, %s35
    %s37 = sphi 0, %s35
    %s38 = sphi 0, %s37
    %s52 = sphi 0, %s38
    %s60 = sphi 0, %s62
    %s63 = sphi 0, %s60
    %s64 = sphi 0, %s63
    %s80 = sphi 0, %s64
    %s90 = sphi 0, %s92
    %s93 = sphi 0, %s90
    %s94 = sphi 0, %s93
    %s110 = sphi 0, %s94
  $region4: #{tpu_custom_call.1} parent=0 // loop_header_branch
    %11 = sbr.rel (%p9) target = $region8
  $region5: #{tpu_custom_call.1} parent=0 // loop_body
    %s13 = ssub.s32 %s8, 1
    %s14 = ssub.s32 %s8, 2
    %s24 = sadd.s32 1, %s17
    %p25 = scmp.ge.s32.totalorder %s24, 1
    %s26 = scalar_select %p25, 0, %s24
    %s27 = sadd.s32 1, %s16
    %s28 = scalar_select %p25, %s27, %s16
    %p29 = scmp.ge.s32.totalorder %s28, 2
    %s30 = scalar_select %p29, 0, %s28
    %s31 = sadd.s32 1, %s15
    %s32 = scalar_select %p29, %s31, %s15
    %p33 = scmp.ge.s32.totalorder %s32, 1
    %s34 = scalar_select %p33, 0, %s32
    %s36 = sadd.s32 %s35, 1
    %p39 = scmp.eq.s32.totalorder %s8, 1
    %p40 = scmp.ne.s32.totalorder %s35, %s37
    %p41 = scmp.eq.s32.totalorder %s8, 0
    %p42 = por %p40, %p41
    %p43 = scmp.ne.s32.totalorder %s35, %s37
    %p44 = scmp.eq.s32.totalorder %s13, 1
    %p45 = por %p43, %p44
    %p46 = scmp.ne.s32.totalorder %s37, %s38
    %p47 = scmp.eq.s32.totalorder %s13, 0
    %p48 = por %p46, %p47
    %p49 = scmp.ne.s32.totalorder %s37, %s38
    %p50 = scmp.eq.s32.totalorder %s14, 1
    %p51 = por %p49, %p50
    %p53 = scmp.ne.s32.totalorder %s38, %s52
    %p54 = scmp.eq.s32.totalorder %s14, 0
    %p55 = por %p53, %p54
    %s56 = ssub.s32 %s16, %s30
    %s57 = ssub.s32 %s17, %s26
    %s58 = sor.u32 %s56, %s57
    %p59 = scmp.eq.s32.totalorder %s58, 0
    %s61 = sadd.s32 %s60, 1
    %s62 = scalar_select %p59, %s60, %s61
    %p65 = pneg %p59
    %p66 = scmp.eq.s32.totalorder %s8, 1
    %p67 = por %p65, %p66
    %p68 = scmp.ne.s32.totalorder %s60, %s63
    %p69 = scmp.eq.s32.totalorder %s8, 0
    %p70 = por %p68, %p69
    %p71 = scmp.ne.s32.totalorder %s60, %s63
    %p72 = scmp.eq.s32.totalorder %s13, 1
    %p73 = por %p71, %p72
    %p74 = scmp.ne.s32.totalorder %s63, %s64
    %p75 = scmp.eq.s32.totalorder %s13, 0
    %p76 = por %p74, %p75
    %p77 = scmp.ne.s32.totalorder %s63, %s64
    %p78 = scmp.eq.s32.totalorder %s14, 1
    %p79 = por %p77, %p78
    %p81 = scmp.ne.s32.totalorder %s64, %s80
    %p82 = scmp.eq.s32.totalorder %s14, 0
    %p83 = por %p81, %p82
    %s84 = ssub.s32 %s16, %s30
    %s85 = ssub.s32 %s15, %s34
    %s86 = sor.u32 %s84, %s85
    %s87 = ssub.s32 %s17, %s26
    %s88 = sor.u32 %s86, %s87
    %p89 = scmp.eq.s32.totalorder %s88, 0
    %s91 = sadd.s32 %s90, 1
    %s92 = scalar_select %p89, %s90, %s91
    %p95 = pneg %p89
    %p96 = scmp.eq.s32.totalorder %s8, 1
    %p97 = por %p95, %p96
    %p98 = scmp.ne.s32.totalorder %s90, %s93
    %p99 = scmp.eq.s32.totalorder %s8, 0
    %p100 = por %p98, %p99
    %p101 = scmp.ne.s32.totalorder %s90, %s93
    %p102 = scmp.eq.s32.totalorder %s13, 1
    %p103 = por %p101, %p102
    %p104 = scmp.ne.s32.totalorder %s93, %s94
    %p105 = scmp.eq.s32.totalorder %s13, 0
    %p106 = por %p104, %p105
    %p107 = scmp.ne.s32.totalorder %s93, %s94
    %p108 = scmp.eq.s32.totalorder %s14, 1
    %p109 = por %p107, %p108
    %p111 = scmp.ne.s32.totalorder %s94, %s110
    %p112 = scmp.eq.s32.totalorder %s14, 0
    %p113 = por %p111, %p112
    %p114 = scmp.le.s32.totalorder 1, %s8
    %p115 = scmp.lt.s32.totalorder %s8, 3
    %p116 = pnand %p114, %p115
    %p117 = pneg %p116
    // Predicated region
    $region9: #{tpu_custom_call.1} parent=5 // pred_check
      _
    $region10: #{tpu_custom_call.1} parent=5 // pred_check_branch
      %119 = sbr.rel (%p116) target = $region12
    $region11: #{tpu_custom_call.1} parent=5 // pred_region
      %s120 = ssub.s32 %s8, 1
      // Predicated region
      $region13: #{tpu_custom_call.1} parent=11 // pred_check
        %p121 = pneg %p48
      $region14: #{tpu_custom_call.1} parent=11 // pred_check_branch
        %123 = sbr.rel (%p121) target = $region16
      $region15: #{tpu_custom_call.1} parent=11 // pred_region
        _
      $region16: #{tpu_custom_call.1} parent=11 // pred_fallthru
        _
    $region12: #{tpu_custom_call.1} parent=5 // pred_fallthru
      _
    %p124 = scmp.lt.s32.totalorder %s8, 2
    // Predicated region
    $region17: #{tpu_custom_call.1} parent=5 // pred_check
      %p125 = pneg %p124
    $region18: #{tpu_custom_call.1} parent=5 // pred_check_branch
      %127 = sbr.rel (%p125) target = $region20
    $region19: #{tpu_custom_call.1} parent=5 // pred_region
      // Predicated region
      $region21: #{tpu_custom_call.1} parent=19 // pred_check
        %p128 = pneg %p70
      $region22: #{tpu_custom_call.1} parent=19 // pred_check_branch
        %130 = sbr.rel (%p128) target = $region24
      $region23: #{tpu_custom_call.1} parent=19 // pred_region
        %s131 = smul.u32 2, %s17
        %p132 = scmp.lt.s32.totalorder %s16, 1
        %s133 = scalar_select %p132, %s16, 1
        %p134 = scmp.lt.s32.totalorder %s131, 1
        %s135 = scalar_select %p134, %s131, 1
        %s136 = smul.addr %s133, 2
        %s137 = sadd.s32 %s135, %s136
        %s138 = smul.addr %s137, 4
        %s139 = scalar_lea.vmem %s1, %s138
        %s140 = smul.u32 2, %s17
      $region24: #{tpu_custom_call.1} parent=19 // pred_fallthru
        _
    $region20: #{tpu_custom_call.1} parent=5 // pred_fallthru
      _
    %p141 = scmp.le.s32.totalorder 1, %s8
    %p142 = scmp.lt.s32.totalorder %s8, 3
    %p143 = pnand %p141, %p142
    %p144 = pneg %p143
    // Predicated region
    $region25: #{tpu_custom_call.1} parent=5 // pred_check
      _
    $region26: #{tpu_custom_call.1} parent=5 // pred_check_branch
      %146 = sbr.rel (%p143) target = $region28
    $region27: #{tpu_custom_call.1} parent=5 // pred_region
      %s147 = ssub.s32 %s8, 1
      %p148 = pneg %p48
      %p149 = pneg %p45
      %s150 = smul.u32 2, %s20
      %p151 = scmp.lt.s32.totalorder %s19, 1
      %s152 = scalar_select %p151, %s19, 1
      %p153 = scmp.lt.s32.totalorder %s150, 1
      %s154 = scalar_select %p153, %s150, 1
      %s155 = smul.addr %s152, 2
      %s156 = sadd.s32 %s154, %s155
      %s157 = smul.addr %s156, 4
      %s158 = scalar_lea.vmem %s1, %s157
      %p159 = pneg %p76
      %p160 = pneg %p73
      %p161 = pneg %p106
      %p162 = pneg %p103
      %s163 = smul.u32 2, %s20
      %p164 = scmp.lt.s32.totalorder %s19, 1
      %s165 = scalar_select %p164, %s19, 1
      %p166 = scmp.lt.s32.totalorder %s18, 0
      %s167 = scalar_select %p166, %s18, 0
      %p168 = scmp.lt.s32.totalorder %s163, 1
      %s169 = scalar_select %p168, %s163, 1
      %s170 = smul.addr %s167, 2
      %s171 = sadd.s32 %s169, %s170
      %s172 = smul.addr %s165, 2
      %s173 = sadd.s32 %s171, %s172
      %s174 = smul.addr %s173, 4
      %s175 = scalar_lea.vmem %s2, %s174
      %s176 = smul.u32 2, %s20
      %p177 = scmp.lt.s32.totalorder %s19, 1
      %s178 = scalar_select %p177, %s19, 1
      %p179 = scmp.lt.s32.totalorder %s176, 1
      %s180 = scalar_select %p179, %s176, 1
      %s181 = smul.addr %s178, 2
      %s182 = sadd.s32 %s180, %s181
      %s183 = smul.addr %s182, 4
      %s184 = scalar_lea.vmem %s1, %s183
      %s185 = smul.u32 2, %s20
      %s186 = smul.u32 2, %s20
      %p187 = scmp.lt.s32.totalorder %s19, 1
      %s188 = scalar_select %p187, %s19, 1
      %p189 = scmp.lt.s32.totalorder %s18, 0
      %s190 = scalar_select %p189, %s18, 0
      %p191 = scmp.lt.s32.totalorder %s186, 1
      %s192 = scalar_select %p191, %s186, 1
      %s193 = smul.addr %s190, 2
      %s194 = sadd.s32 %s192, %s193
      %s195 = smul.addr %s188, 2
      %s196 = sadd.s32 %s194, %s195
      %s197 = smul.addr %s196, 4
      %s198 = scalar_lea.vmem %s2, %s197
      %s199 = smul.u32 2, %s20
      %v200 = vld [vmem:[%s184] ss:$4 sm:$0x3]
      %s201 = scalar_lea.vmem %s184, 1
      %v202 = vld [vmem:[%s201] ss:$4 sm:$0x3]
      %s203 = scalar_lea.vmem %s184, 2
      %v204 = vld [vmem:[%s203] ss:$4 sm:$0x3]
      %v205 = vmul.f32 %v200, 6.999993
      %v206 = vmul.f32 %v202, 6.999993
      %v207 = vmul.f32 %v204, 6.999993
      %v208 = vlaneseq
      %v209 = vshrl.u32 %v208, 7
      %v210 = vcvt.s32.f32 %v209
      %v212 = vlaneseq
      %v213 = vshrl.u32 %v212, 7
      %v214 = vsub.s32 0, %v213
      %v215 = vrot.slane %v205, %v214
      %v216 = vlaneseq
      %v217 = vshrl.u32 %v216, 7
      %v218 = vsub.s32 1, %v217
      %v219 = vrot.slane %v205, %v218
      %v222 = vsub.f32 %v210, %v215
      %v223 = vsub.f32 %v210, %v219
      %v224 = vand.u32 2147483647, %v222
      %v225 = vand.u32 2147483647, %v223
      %v226 = vsub.f32 1.0, %v224
      %v227 = vsub.f32 1.0, %v225
      %v228 = vmax.f32 %v226, 0.0
      %v229 = vmax.f32 %v227, 0.0
      %v231 = vlaneseq
      %v232 = vshrl.u32 %v231, 7
      %v233 = vsub.s32 0, %v232
      %v234 = vrot.slane %v206, %v233
      %v235 = vlaneseq
      %v236 = vshrl.u32 %v235, 7
      %v237 = vsub.s32 1, %v236
      %v238 = vrot.slane %v206, %v237
      %v241 = vsub.f32 %v210, %v234
      %v242 = vsub.f32 %v210, %v238
      %v243 = vand.u32 2147483647, %v241
      %v244 = vand.u32 2147483647, %v242
      %v245 = vsub.f32 1.0, %v243
      %v246 = vsub.f32 1.0, %v244
      %v247 = vmax.f32 %v245, 0.0
      %v248 = vmax.f32 %v246, 0.0
      %v250 = vlaneseq
      %v251 = vshrl.u32 %v250, 7
      %v252 = vsub.s32 0, %v251
      %v253 = vrot.slane %v207, %v252
      %v254 = vlaneseq
      %v255 = vshrl.u32 %v254, 7
      %v256 = vsub.s32 1, %v255
      %v257 = vrot.slane %v207, %v256
      %v260 = vsub.f32 %v210, %v253
      %v261 = vsub.f32 %v210, %v257
      %v262 = vand.u32 2147483647, %v260
      %v263 = vand.u32 2147483647, %v261
      %v264 = vsub.f32 1.0, %v262
      %v265 = vsub.f32 1.0, %v263
      %v266 = vmax.f32 %v264, 0.0
      %v267 = vmax.f32 %v265, 0.0
      %v270 = vcombine.low %v247, %v248
      %v271 = vcombine.high %v247, %v248
      %v273 = vunpack.c.l.s4 1966171168
      %v274 = vunpack.c.0.s8 %v273
      %v275 = vlaneseq
      %v276 = vshrl.u32 %v275, 7
      %v277 = vsub.s32 %v274, %v276
      %v278 = vrot.slane %v270, %v277
      %v280 = vunpack.c.l.s4 1966171168
      %v281 = vunpack.c.0.s8 %v280
      %v282 = vlaneseq
      %v283 = vshrl.u32 %v282, 7
      %v284 = vsub.s32 %v281, %v283
      %v285 = vrot.slane %v271, %v284
      %v286 = vcombine.high %v278, %v278
      %v287 = vcombine.high %v285, %v285
      %v289 = vunpack.c.l.s4 1966171168
      %v290 = vunpack.c.0.s8 %v289
      %v291 = vlaneseq
      %v292 = vshrl.u32 %v291, 7
      %v293 = vsub.s32 %v290, %v292
      %v294 = vrot.slane %v278, %v293
      %v296 = vunpack.c.l.s4 1966171168
      %v297 = vunpack.c.0.s8 %v296
      %v298 = vlaneseq
      %v299 = vshrl.u32 %v298, 7
      %v300 = vsub.s32 %v297, %v299
      %v301 = vrot.slane %v285, %v300
      %v303 = vunpack.c.l.s4 1966171168
      %v304 = vunpack.c.0.s8 %v303
      %v305 = vlaneseq
      %v306 = vshrl.u32 %v305, 7
      %v307 = vsub.s32 %v304, %v306
      %v308 = vrot.slane %v286, %v307
      %v310 = vunpack.c.l.s4 1966171168
      %v311 = vunpack.c.0.s8 %v310
      %v312 = vlaneseq
      %v313 = vshrl.u32 %v312, 7
      %v314 = vsub.s32 %v311, %v313
      %v315 = vrot.slane %v287, %v314
      %v316 = vcombine.high %v294, %v294
      %v317 = vcombine.high %v301, %v301
      %v318 = vcombine.high %v308, %v308
      %v319 = vcombine.high %v315, %v315
      %v320 = vlaneseq
      %v321 = vshrl.u32 %v320, 7
      %v322 = vsub.s32 0, %v321
      %v323 = vrot.slane %v294, %v322
      %v324 = vlaneseq
      %v325 = vshrl.u32 %v324, 7
      %v326 = vsub.s32 1, %v325
      %v327 = vrot.slane %v294, %v326
      %v328 = vlaneseq
      %v329 = vshrl.u32 %v328, 7
      %v330 = vsub.s32 0, %v329
      %v331 = vrot.slane %v308, %v330
      %v332 = vlaneseq
      %v333 = vshrl.u32 %v332, 7
      %v334 = vsub.s32 1, %v333
      %v335 = vrot.slane %v308, %v334
      %v336 = vlaneseq
      %v337 = vshrl.u32 %v336, 7
      %v338 = vsub.s32 0, %v337
      %v339 = vrot.slane %v316, %v338
      %v340 = vlaneseq
      %v341 = vshrl.u32 %v340, 7
      %v342 = vsub.s32 1, %v341
      %v343 = vrot.slane %v316, %v342
      %v344 = vlaneseq
      %v345 = vshrl.u32 %v344, 7
      %v346 = vsub.s32 0, %v345
      %v347 = vrot.slane %v318, %v346
      %v348 = vlaneseq
      %v349 = vshrl.u32 %v348, 7
      %v350 = vsub.s32 1, %v349
      %v351 = vrot.slane %v318, %v350
      %v352 = vlaneseq
      %v353 = vshrl.u32 %v352, 7
      %v354 = vsub.s32 0, %v353
      %v355 = vrot.slane %v301, %v354
      %v356 = vlaneseq
      %v357 = vshrl.u32 %v356, 7
      %v358 = vsub.s32 1, %v357
      %v359 = vrot.slane %v301, %v358
      %v360 = vlaneseq
      %v361 = vshrl.u32 %v360, 7
      %v362 = vsub.s32 0, %v361
      %v363 = vrot.slane %v315, %v362
      %v364 = vlaneseq
      %v365 = vshrl.u32 %v364, 7
      %v366 = vsub.s32 1, %v365
      %v367 = vrot.slane %v315, %v366
      %v368 = vlaneseq
      %v369 = vshrl.u32 %v368, 7
      %v370 = vsub.s32 0, %v369
      %v371 = vrot.slane %v317, %v370
      %v372 = vlaneseq
      %v373 = vshrl.u32 %v372, 7
      %v374 = vsub.s32 1, %v373
      %v375 = vrot.slane %v317, %v374
      %v376 = vlaneseq
      %v377 = vshrl.u32 %v376, 7
      %v378 = vsub.s32 0, %v377
      %v379 = vrot.slane %v319, %v378
      %v380 = vlaneseq
      %v381 = vshrl.u32 %v380, 7
      %v382 = vsub.s32 1, %v381
      %v383 = vrot.slane %v319, %v382
      %v400 = vmul.f32 %v323, %v228
      %v401 = vmul.f32 %v327, %v229
      %v402 = vmul.f32 %v331, %v228
      %v403 = vmul.f32 %v335, %v229
      %v404 = vmul.f32 %v339, %v228
      %v405 = vmul.f32 %v343, %v229
      %v406 = vmul.f32 %v347, %v228
      %v407 = vmul.f32 %v351, %v229
      %v408 = vmul.f32 %v355, %v228
      %v409 = vmul.f32 %v359, %v229
      %v410 = vmul.f32 %v363, %v228
      %v411 = vmul.f32 %v367, %v229
      %v412 = vmul.f32 %v371, %v228
      %v413 = vmul.f32 %v375, %v229
      %v414 = vmul.f32 %v379, %v228
      %v415 = vmul.f32 %v383, %v229
      %v416 = vld [vmem:[%s0] sm:$0xff]
      %v417 = vld [vmem:[%s0 + $0x8] sm:$0xff]
      %v418 = vld [vmem:[%s0 + $0x10] sm:$0xff]
      %vm419 = vcmask 523264
      %v421 = vsel %vm419, %v416, 0
      %v424 = vsel %vm419, %v417, 0
      %v427 = vsel %vm419, %v418, 0
      %v429 = vand.u32 %v401, 4294901760
      %430 = vmatprep.subr.mxu0 %v429
      %v431 = vand.u32 %v400, 4294901760
      %432 = vmatpush1.msra.mxu0 %v431
      %v433 = vand.u32 %v403, 4294901760
      %434 = vmatprep.subr.mxu0 %v433
      %v435 = vand.u32 %v402, 4294901760
      %436 = vmatpush1.msra.mxu0 %v435
      %v437 = vand.u32 %v405, 4294901760
      %438 = vmatprep.subr.mxu0 %v437
      %v439 = vand.u32 %v404, 4294901760
      %440 = vmatpush1.msra.mxu0 %v439
      %v441 = vand.u32 %v407, 4294901760
      %442 = vmatprep.subr.mxu0 %v441
      %v443 = vand.u32 %v406, 4294901760
      %444 = vmatpush1.msra.mxu0 %v443
      %v445 = vand.u32 %v409, 4294901760
      %446 = vmatprep.subr.mxu0 %v445
      %v447 = vand.u32 %v408, 4294901760
      %448 = vmatpush1.msra.mxu0 %v447
      %v449 = vand.u32 %v411, 4294901760
      %450 = vmatprep.subr.mxu0 %v449
      %v451 = vand.u32 %v410, 4294901760
      %452 = vmatpush1.msra.mxu0 %v451
      %v453 = vand.u32 %v413, 4294901760
      %454 = vmatprep.subr.mxu0 %v453
      %v455 = vand.u32 %v412, 4294901760
      %456 = vmatpush1.msra.mxu0 %v455
      %v457 = vand.u32 %v415, 4294901760
      %458 = vmatprep.subr.mxu0 %v457
      %v459 = vand.u32 %v414, 4294901760
      %460 = vmatpush1.msra.mxu0 %v459
      %461 = vmatprep.subr.mxu0 0.0
      %462 = vmatpush1.msra.mxu0 0.0
      %463 = vmatprep.subr.mxu0 0.0
      %464 = vmatpush1.msra.mxu0 0.0
      %465 = vmatprep.subr.mxu0 0.0
      %466 = vmatpush1.msra.mxu0 0.0
      %467 = vmatprep.subr.mxu0 0.0
      %468 = vmatpush1.msra.mxu0 0.0
      %469 = vmatprep.subr.mxu0 0.0
      %470 = vmatpush1.msra.mxu0 0.0
      %471 = vmatprep.subr.mxu0 0.0
      %472 = vmatpush1.msra.mxu0 0.0
      %473 = vmatprep.subr.mxu0 0.0
      %474 = vmatpush1.msra.mxu0 0.0
      %475 = vmatprep.subr.mxu0 0.0
      %476 = vmatpush1.msra.mxu0 0.0
      %477 = vmatprep.subr.mxu0 0.0
      %478 = vmatpush1.msra.mxu0 0.0
      %479 = vmatprep.subr.mxu0 0.0
      %480 = vmatpush1.msra.mxu0 0.0
      %481 = vmatprep.subr.mxu0 0.0
      %482 = vmatpush1.msra.mxu0 0.0
      %483 = vmatprep.subr.mxu0 0.0
      %484 = vmatpush1.msra.mxu0 0.0
      %485 = vmatprep.subr.mxu0 0.0
      %486 = vmatpush1.msra.mxu0 0.0
      %487 = vmatprep.subr.mxu0 0.0
      %488 = vmatpush1.msra.mxu0 0.0
      %489 = vmatprep.subr.mxu0 0.0
      %490 = vmatpush1.msra.mxu0 0.0
      %491 = vmatprep.subr.mxu0 0.0
      %492 = vmatpush1.msra.mxu0 0.0
      %493 = vmatprep.subr.mxu0 0.0
      %494 = vmatpush1.msra.mxu0 0.0
      %495 = vmatprep.subr.mxu0 0.0
      %496 = vmatpush1.msra.mxu0 0.0
      %497 = vmatprep.subr.mxu0 0.0
      %498 = vmatpush1.msra.mxu0 0.0
      %499 = vmatprep.subr.mxu0 0.0
      %500 = vmatpush1.msra.mxu0 0.0
      %501 = vmatprep.subr.mxu0 0.0
      %502 = vmatpush1.msra.mxu0 0.0
      %503 = vmatprep.subr.mxu0 0.0
      %504 = vmatpush1.msra.mxu0 0.0
      %505 = vmatprep.subr.mxu0 0.0
      %506 = vmatpush1.msra.mxu0 0.0
      %507 = vmatprep.subr.mxu0 0.0
      %508 = vmatpush1.msra.mxu0 0.0
      %509 = vmatprep.mubr.f32.mxu0 0.0
      %v510 = vand.u32 %v421, 4294901760
      %v511 = vsub.f32 %v421, %v510
      %v512 = vand.u32 %v511, 4294901760
      %v513 = vsub.f32 %v511, %v512
      %v514 = vand.u32 %v513, 4294901760
      %515 = vmatmul.mubr.f32.gmra.mrb[0].mxu0 %v514
      %v516 = vpop.f32.mrb[0].mxu0
      %v517 = vadd.f32 0.0, %v516
      %v518 = vpop.f32.mrb[0].mxu0
      %v519 = vadd.f32 0.0, %v518
      %520 = vmatprep.mubr.f32.mxu0 0.0
      %v521 = vand.u32 %v424, 4294901760
      %v522 = vsub.f32 %v424, %v521
      %v523 = vand.u32 %v522, 4294901760
      %v524 = vsub.f32 %v522, %v523
      %v525 = vand.u32 %v524, 4294901760
      %526 = vmatmul.mubr.f32.gmra.mrb[0].mxu0 %v525
      %v527 = vpop.f32.mrb[0].mxu0
      %v528 = vadd.f32 0.0, %v527
      %v529 = vpop.f32.mrb[0].mxu0
      %v530 = vadd.f32 0.0, %v529
      %531 = vmatprep.mubr.f32.mxu0 0.0
      %v532 = vand.u32 %v427, 4294901760
      %v533 = vsub.f32 %v427, %v532
      %v534 = vand.u32 %v533, 4294901760
      %v535 = vsub.f32 %v533, %v534
      %v536 = vand.u32 %v535, 4294901760
      %537 = vmatmul.mubr.f32.gmra.mrb[0].mxu0 %v536
      %v538 = vpop.f32.mrb[0].mxu0
      %v539 = vadd.f32 0.0, %v538
      %v540 = vpop.f32.mrb[0].mxu0
      %v541 = vadd.f32 0.0, %v540
      %542 = vdwg.mxu0
      %v543 = vand.u32 %v401, 4294901760
      %v544 = vsub.f32 %v401, %v543
      %v545 = vand.u32 %v544, 4294901760
      %v546 = vsub.f32 %v544, %v545
      %v547 = vand.u32 %v546, 4294901760
      %548 = vmatprep.subr.mxu0 %v547
      %v549 = vand.u32 %v400, 4294901760
      %v550 = vsub.f32 %v400, %v549
      %v551 = vand.u32 %v550, 4294901760
      %v552 = vsub.f32 %v550, %v551
      %v553 = vand.u32 %v552, 4294901760
      %554 = vmatpush1.msra.mxu0 %v553
      %v555 = vand.u32 %v403, 4294901760
      %v556 = vsub.f32 %v403, %v555
      %v557 = vand.u32 %v556, 4294901760
      %v558 = vsub.f32 %v556, %v557
      %v559 = vand.u32 %v558, 4294901760
      %560 = vmatprep.subr.mxu0 %v559
      %v561 = vand.u32 %v402, 4294901760
      %v562 = vsub.f32 %v402, %v561
      %v563 = vand.u32 %v562, 4294901760
      %v564 = vsub.f32 %v562, %v563
      %v565 = vand.u32 %v564, 4294901760
      %566 = vmatpush1.msra.mxu0 %v565
      %v567 = vand.u32 %v405, 4294901760
      %v568 = vsub.f32 %v405, %v567
      %v569 = vand.u32 %v568, 4294901760
      %v570 = vsub.f32 %v568, %v569
      %v571 = vand.u32 %v570, 4294901760
      %572 = vmatprep.subr.mxu0 %v571
      %v573 = vand.u32 %v404, 4294901760
      %v574 = vsub.f32 %v404, %v573
      %v575 = vand.u32 %v574, 4294901760
      %v576 = vsub.f32 %v574, %v575
      %v577 = vand.u32 %v576, 4294901760
      %578 = vmatpush1.msra.mxu0 %v577
      %v579 = vand.u32 %v407, 4294901760
      %v580 = vsub.f32 %v407, %v579
      %v581 = vand.u32 %v580, 4294901760
      %v582 = vsub.f32 %v580, %v581
      %v583 = vand.u32 %v582, 4294901760
      %584 = vmatprep.subr.mxu0 %v583
      %v585 = vand.u32 %v406, 4294901760
      %v586 = vsub.f32 %v406, %v585
      %v587 = vand.u32 %v586, 4294901760
      %v588 = vsub.f32 %v586, %v587
      %v589 = vand.u32 %v588, 4294901760
      %590 = vmatpush1.msra.mxu0 %v589
      %v591 = vand.u32 %v409, 4294901760
      %v592 = vsub.f32 %v409, %v591
      %v593 = vand.u32 %v592, 4294901760
      %v594 = vsub.f32 %v592, %v593
      %v595 = vand.u32 %v594, 4294901760
      %596 = vmatprep.subr.mxu0 %v595
      %v597 = vand.u32 %v408, 4294901760
      %v598 = vsub.f32 %v408, %v597
      %v599 = vand.u32 %v598, 4294901760
      %v600 = vsub.f32 %v598, %v599
      %v601 = vand.u32 %v600, 4294901760
      %602 = vmatpush1.msra.mxu0 %v601
      %v603 = vand.u32 %v411, 4294901760
      %v604 = vsub.f32 %v411, %v603
      %v605 = vand.u32 %v604, 4294901760
      %v606 = vsub.f32 %v604, %v605
      %v607 = vand.u32 %v606, 4294901760
      %608 = vmatprep.subr.mxu0 %v607
      %v609 = vand.u32 %v410, 4294901760
      %v610 = vsub.f32 %v410, %v609
      %v611 = vand.u32 %v610, 4294901760
      %v612 = vsub.f32 %v610, %v611
      %v613 = vand.u32 %v612, 4294901760
      %614 = vmatpush1.msra.mxu0 %v613
      %v615 = vand.u32 %v413, 4294901760
      %v616 = vsub.f32 %v413, %v615
      %v617 = vand.u32 %v616, 4294901760
      %v618 = vsub.f32 %v616, %v617
      %v619 = vand.u32 %v618, 4294901760
      %620 = vmatprep.subr.mxu0 %v619
      %v621 = vand.u32 %v412, 4294901760
      %v622 = vsub.f32 %v412, %v621
      %v623 = vand.u32 %v622, 4294901760
      %v624 = vsub.f32 %v622, %v623
      %v625 = vand.u32 %v624, 4294901760
      %626 = vmatpush1.msra.mxu0 %v625
      %v627 = vand.u32 %v415, 4294901760
      %v628 = vsub.f32 %v415, %v627
      %v629 = vand.u32 %v628, 4294901760
      %v630 = vsub.f32 %v628, %v629
      %v631 = vand.u32 %v630, 4294901760
      %632 = vmatprep.subr.mxu0 %v631
      %v633 = vand.u32 %v414, 4294901760
      %v634 = vsub.f32 %v414, %v633
      %v635 = vand.u32 %v634, 4294901760
      %v636 = vsub.f32 %v634, %v635
      %v637 = vand.u32 %v636, 4294901760
      %638 = vmatpush1.msra.mxu0 %v637
      %639 = vmatprep.subr.mxu0 0.0
      %640 = vmatpush1.msra.mxu0 0.0
      %641 = vmatprep.subr.mxu0 0.0
      %642 = vmatpush1.msra.mxu0 0.0
      %643 = vmatprep.subr.mxu0 0.0
      %644 = vmatpush1.msra.mxu0 0.0
      %645 = vmatprep.subr.mxu0 0.0
      %646 = vmatpush1.msra.mxu0 0.0
      %647 = vmatprep.subr.mxu0 0.0
      %648 = vmatpush1.msra.mxu0 0.0
      %649 = vmatprep.subr.mxu0 0.0
      %650 = vmatpush1.msra.mxu0 0.0
      %651 = vmatprep.subr.mxu0 0.0
      %652 = vmatpush1.msra.mxu0 0.0
      %653 = vmatprep.subr.mxu0 0.0
      %654 = vmatpush1.msra.mxu0 0.0
      %655 = vmatprep.subr.mxu0 0.0
      %656 = vmatpush1.msra.mxu0 0.0
      %657 = vmatprep.subr.mxu0 0.0
      %658 = vmatpush1.msra.mxu0 0.0
      %659 = vmatprep.subr.mxu0 0.0
      %660 = vmatpush1.msra.mxu0 0.0
      %661 = vmatprep.subr.mxu0 0.0
      %662 = vmatpush1.msra.mxu0 0.0
      %663 = vmatprep.subr.mxu0 0.0
      %664 = vmatpush1.msra.mxu0 0.0
      %665 = vmatprep.subr.mxu0 0.0
      %666 = vmatpush1.msra.mxu0 0.0
      %667 = vmatprep.subr.mxu0 0.0
      %668 = vmatpush1.msra.mxu0 0.0
      %669 = vmatprep.subr.mxu0 0.0
      %670 = vmatpush1.msra.mxu0 0.0
      %671 = vmatprep.subr.mxu0 0.0
      %672 = vmatpush1.msra.mxu0 0.0
      %673 = vmatprep.subr.mxu0 0.0
      %674 = vmatpush1.msra.mxu0 0.0
      %675 = vmatprep.subr.mxu0 0.0
      %676 = vmatpush1.msra.mxu0 0.0
      %677 = vmatprep.subr.mxu0 0.0
      %678 = vmatpush1.msra.mxu0 0.0
      %679 = vmatprep.subr.mxu0 0.0
      %680 = vmatpush1.msra.mxu0 0.0
      %681 = vmatprep.subr.mxu0 0.0
      %682 = vmatpush1.msra.mxu0 0.0
      %683 = vmatprep.subr.mxu0 0.0
      %684 = vmatpush1.msra.mxu0 0.0
      %685 = vmatprep.subr.mxu0 0.0
      %686 = vmatpush1.msra.mxu0 0.0
      %687 = vmatprep.mubr.f32.mxu0 0.0
      %v688 = vand.u32 %v421, 4294901760
      %689 = vmatmul.mubr.f32.gmra.mrb[0].mxu0 %v688
      %v690 = vpop.f32.mrb[0].mxu0
      %v691 = vadd.f32 %v517, %v690
      %v692 = vpop.f32.mrb[0].mxu0
      %v693 = vadd.f32 %v519, %v692
      %694 = vmatprep.mubr.f32.mxu0 0.0
      %v695 = vand.u32 %v424, 4294901760
      %696 = vmatmul.mubr.f32.gmra.mrb[0].mxu0 %v695
      %v697 = vpop.f32.mrb[0].mxu0
      %v698 = vadd.f32 %v528, %v697
      %v699 = vpop.f32.mrb[0].mxu0
      %v700 = vadd.f32 %v530, %v699
      %701 = vmatprep.mubr.f32.mxu0 0.0
      %v702 = vand.u32 %v427, 4294901760
      %703 = vmatmul.mubr.f32.gmra.mrb[0].mxu0 %v702
      %v704 = vpop.f32.mrb[0].mxu0
      %v705 = vadd.f32 %v539, %v704
      %v706 = vpop.f32.mrb[0].mxu0
      %v707 = vadd.f32 %v541, %v706
      %708 = vdwg.mxu0
      %v709 = vand.u32 %v401, 4294901760
      %v710 = vsub.f32 %v401, %v709
      %711 = vmatprep.subr.mxu0 %v710
      %v712 = vand.u32 %v400, 4294901760
      %v713 = vsub.f32 %v400, %v712
      %714 = vmatpush1.msra.mxu0 %v713
      %v715 = vand.u32 %v403, 4294901760
      %v716 = vsub.f32 %v403, %v715
      %717 = vmatprep.subr.mxu0 %v716
      %v718 = vand.u32 %v402, 4294901760
      %v719 = vsub.f32 %v402, %v718
      %720 = vmatpush1.msra.mxu0 %v719
      %v721 = vand.u32 %v405, 4294901760
      %v722 = vsub.f32 %v405, %v721
      %723 = vmatprep.subr.mxu0 %v722
      %v724 = vand.u32 %v404, 4294901760
      %v725 = vsub.f32 %v404, %v724
      %726 = vmatpush1.msra.mxu0 %v725
      %v727 = vand.u32 %v407, 4294901760
      %v728 = vsub.f32 %v407, %v727
      %729 = vmatprep.subr.mxu0 %v728
      %v730 = vand.u32 %v406, 4294901760
      %v731 = vsub.f32 %v406, %v730
      %732 = vmatpush1.msra.mxu0 %v731
      %v733 = vand.u32 %v409, 4294901760
      %v734 = vsub.f32 %v409, %v733
      %735 = vmatprep.subr.mxu0 %v734
      %v736 = vand.u32 %v408, 4294901760
      %v737 = vsub.f32 %v408, %v736
      %738 = vmatpush1.msra.mxu0 %v737
      %v739 = vand.u32 %v411, 4294901760
      %v740 = vsub.f32 %v411, %v739
      %741 = vmatprep.subr.mxu0 %v740
      %v742 = vand.u32 %v410, 4294901760
      %v743 = vsub.f32 %v410, %v742
      %744 = vmatpush1.msra.mxu0 %v743
      %v745 = vand.u32 %v413, 4294901760
      %v746 = vsub.f32 %v413, %v745
      %747 = vmatprep.subr.mxu0 %v746
      %v748 = vand.u32 %v412, 4294901760
      %v749 = vsub.f32 %v412, %v748
      %750 = vmatpush1.msra.mxu0 %v749
      %v751 = vand.u32 %v415, 4294901760
      %v752 = vsub.f32 %v415, %v751
      %753 = vmatprep.subr.mxu0 %v752
      %v754 = vand.u32 %v414, 4294901760
      %v755 = vsub.f32 %v414, %v754
      %756 = vmatpush1.msra.mxu0 %v755
      %757 = vmatprep.subr.mxu0 0.0
      %758 = vmatpush1.msra.mxu0 0.0
      %759 = vmatprep.subr.mxu0 0.0
      %760 = vmatpush1.msra.mxu0 0.0
      %761 = vmatprep.subr.mxu0 0.0
      %762 = vmatpush1.msra.mxu0 0.0
      %763 = vmatprep.subr.mxu0 0.0
      %764 = vmatpush1.msra.mxu0 0.0
      %765 = vmatprep.subr.mxu0 0.0
      %766 = vmatpush1.msra.mxu0 0.0
      %767 = vmatprep.subr.mxu0 0.0
      %768 = vmatpush1.msra.mxu0 0.0
      %769 = vmatprep.subr.mxu0 0.0
      %770 = vmatpush1.msra.mxu0 0.0
      %771 = vmatprep.subr.mxu0 0.0
      %772 = vmatpush1.msra.mxu0 0.0
      %773 = vmatprep.subr.mxu0 0.0
      %774 = vmatpush1.msra.mxu0 0.0
      %775 = vmatprep.subr.mxu0 0.0
      %776 = vmatpush1.msra.mxu0 0.0
      %777 = vmatprep.subr.mxu0 0.0
      %778 = vmatpush1.msra.mxu0 0.0
      %779 = vmatprep.subr.mxu0 0.0
      %780 = vmatpush1.msra.mxu0 0.0
      %781 = vmatprep.subr.mxu0 0.0
      %782 = vmatpush1.msra.mxu0 0.0
      %783 = vmatprep.subr.mxu0 0.0
      %784 = vmatpush1.msra.mxu0 0.0
      %785 = vmatprep.subr.mxu0 0.0
      %786 = vmatpush1.msra.mxu0 0.0
      %787 = vmatprep.subr.mxu0 0.0
      %788 = vmatpush1.msra.mxu0 0.0
      %789 = vmatprep.subr.mxu0 0.0
      %790 = vmatpush1.msra.mxu0 0.0
      %791 = vmatprep.subr.mxu0 0.0
      %792 = vmatpush1.msra.mxu0 0.0
      %793 = vmatprep.subr.mxu0 0.0
      %794 = vmatpush1.msra.mxu0 0.0
      %795 = vmatprep.subr.mxu0 0.0
      %796 = vmatpush1.msra.mxu0 0.0
      %797 = vmatprep.subr.mxu0 0.0
      %798 = vmatpush1.msra.mxu0 0.0
      %799 = vmatprep.subr.mxu0 0.0
      %800 = vmatpush1.msra.mxu0 0.0
      %801 = vmatprep.subr.mxu0 0.0
      %802 = vmatpush1.msra.mxu0 0.0
      %803 = vmatprep.subr.mxu0 0.0
      %804 = vmatpush1.msra.mxu0 0.0
      %805 = vmatprep.mubr.f32.mxu0 0.0
      %v806 = vand.u32 %v421, 4294901760
      %v807 = vsub.f32 %v421, %v806
      %808 = vmatmul.mubr.f32.gmra.mrb[0].mxu0 %v807
      %v809 = vpop.f32.mrb[0].mxu0
      %v810 = vadd.f32 %v691, %v809
      %v811 = vpop.f32.mrb[0].mxu0
      %v812 = vadd.f32 %v693, %v811
      %813 = vmatprep.mubr.f32.mxu0 0.0
      %v814 = vand.u32 %v424, 4294901760
      %v815 = vsub.f32 %v424, %v814
      %816 = vmatmul.mubr.f32.gmra.mrb[0].mxu0 %v815
      %v817 = vpop.f32.mrb[0].mxu0
      %v818 = vadd.f32 %v698, %v817
      %v819 = vpop.f32.mrb[0].mxu0
      %v820 = vadd.f32 %v700, %v819
      %821 = vmatprep.mubr.f32.mxu0 0.0
      %v822 = vand.u32 %v427, 4294901760
      %v823 = vsub.f32 %v427, %v822
      %824 = vmatmul.mubr.f32.gmra.mrb[0].mxu0 %v823
      %v825 = vpop.f32.mrb[0].mxu0
      %v826 = vadd.f32 %v705, %v825
      %v827 = vpop.f32.mrb[0].mxu0
      %v828 = vadd.f32 %v707, %v827
      %829 = vdwg.mxu0
      %v830 = vand.u32 %v401, 4294901760
      %831 = vmatprep.subr.mxu0 %v830
      %v832 = vand.u32 %v400, 4294901760
      %833 = vmatpush1.msra.mxu0 %v832
      %v834 = vand.u32 %v403, 4294901760
      %835 = vmatprep.subr.mxu0 %v834
      %v836 = vand.u32 %v402, 4294901760
      %837 = vmatpush1.msra.mxu0 %v836
      %v838 = vand.u32 %v405, 4294901760
      %839 = vmatprep.subr.mxu0 %v838
      %v840 = vand.u32 %v404, 4294901760
      %841 = vmatpush1.msra.mxu0 %v840
      %v842 = vand.u32 %v407, 4294901760
      %843 = vmatprep.subr.mxu0 %v842
      %v844 = vand.u32 %v406, 4294901760
      %845 = vmatpush1.msra.mxu0 %v844
      %v846 = vand.u32 %v409, 4294901760
      %847 = vmatprep.subr.mxu0 %v846
      %v848 = vand.u32 %v408, 4294901760
      %849 = vmatpush1.msra.mxu0 %v848
      %v850 = vand.u32 %v411, 4294901760
      %851 = vmatprep.subr.mxu0 %v850
      %v852 = vand.u32 %v410, 4294901760
      %853 = vmatpush1.msra.mxu0 %v852
      %v854 = vand.u32 %v413, 4294901760
      %855 = vmatprep.subr.mxu0 %v854
      %v856 = vand.u32 %v412, 4294901760
      %857 = vmatpush1.msra.mxu0 %v856
      %v858 = vand.u32 %v415, 4294901760
      %859 = vmatprep.subr.mxu0 %v858
      %v860 = vand.u32 %v414, 4294901760
      %861 = vmatpush1.msra.mxu0 %v860
      %862 = vmatprep.subr.mxu0 0.0
      %863 = vmatpush1.msra.mxu0 0.0
      %864 = vmatprep.subr.mxu0 0.0
      %865 = vmatpush1.msra.mxu0 0.0
      %866 = vmatprep.subr.mxu0 0.0
      %867 = vmatpush1.msra.mxu0 0.0
      %868 = vmatprep.subr.mxu0 0.0
      %869 = vmatpush1.msra.mxu0 0.0
      %870 = vmatprep.subr.mxu0 0.0
      %871 = vmatpush1.msra.mxu0 0.0
      %872 = vmatprep.subr.mxu0 0.0
      %873 = vmatpush1.msra.mxu0 0.0
      %874 = vmatprep.subr.mxu0 0.0
      %875 = vmatpush1.msra.mxu0 0.0
      %876 = vmatprep.subr.mxu0 0.0
      %877 = vmatpush1.msra.mxu0 0.0
      %878 = vmatprep.subr.mxu0 0.0
      %879 = vmatpush1.msra.mxu0 0.0
      %880 = vmatprep.subr.mxu0 0.0
      %881 = vmatpush1.msra.mxu0 0.0
      %882 = vmatprep.subr.mxu0 0.0
      %883 = vmatpush1.msra.mxu0 0.0
      %884 = vmatprep.subr.mxu0 0.0
      %885 = vmatpush1.msra.mxu0 0.0
      %886 = vmatprep.subr.mxu0 0.0
      %887 = vmatpush1.msra.mxu0 0.0
      %888 = vmatprep.subr.mxu0 0.0
      %889 = vmatpush1.msra.mxu0 0.0
      %890 = vmatprep.subr.mxu0 0.0
      %891 = vmatpush1.msra.mxu0 0.0
      %892 = vmatprep.subr.mxu0 0.0
      %893 = vmatpush1.msra.mxu0 0.0
      %894 = vmatprep.subr.mxu0 0.0
      %895 = vmatpush1.msra.mxu0 0.0
      %896 = vmatprep.subr.mxu0 0.0
      %897 = vmatpush1.msra.mxu0 0.0
      %898 = vmatprep.subr.mxu0 0.0
      %899 = vmatpush1.msra.mxu0 0.0
      %900 = vmatprep.subr.mxu0 0.0
      %901 = vmatpush1.msra.mxu0 0.0
      %902 = vmatprep.subr.mxu0 0.0
      %903 = vmatpush1.msra.mxu0 0.0
      %904 = vmatprep.subr.mxu0 0.0
      %905 = vmatpush1.msra.mxu0 0.0
      %906 = vmatprep.subr.mxu0 0.0
      %907 = vmatpush1.msra.mxu0 0.0
      %908 = vmatprep.subr.mxu0 0.0
      %909 = vmatpush1.msra.mxu0 0.0
      %910 = vmatprep.mubr.f32.mxu0 0.0
      %v911 = vand.u32 %v421, 4294901760
      %v912 = vsub.f32 %v421, %v911
      %v913 = vand.u32 %v912, 4294901760
      %914 = vmatmul.mubr.f32.gmra.mrb[0].mxu0 %v913
      %v915 = vpop.f32.mrb[0].mxu0
      %v916 = vadd.f32 %v810, %v915
      %v917 = vpop.f32.mrb[0].mxu0
      %v918 = vadd.f32 %v812, %v917
      %919 = vmatprep.mubr.f32.mxu0 0.0
      %v920 = vand.u32 %v424, 4294901760
      %v921 = vsub.f32 %v424, %v920
      %v922 = vand.u32 %v921, 4294901760
      %923 = vmatmul.mubr.f32.gmra.mrb[0].mxu0 %v922
      %v924 = vpop.f32.mrb[0].mxu0
      %v925 = vadd.f32 %v818, %v924
      %v926 = vpop.f32.mrb[0].mxu0
      %v927 = vadd.f32 %v820, %v926
      %928 = vmatprep.mubr.f32.mxu0 0.0
      %v929 = vand.u32 %v427, 4294901760
      %v930 = vsub.f32 %v427, %v929
      %v931 = vand.u32 %v930, 4294901760
      %932 = vmatmul.mubr.f32.gmra.mrb[0].mxu0 %v931
      %v933 = vpop.f32.mrb[0].mxu0
      %v934 = vadd.f32 %v826, %v933
      %v935 = vpop.f32.mrb[0].mxu0
      %v936 = vadd.f32 %v828, %v935
      %937 = vdwg.mxu0
      %v938 = vand.u32 %v401, 4294901760
      %v939 = vsub.f32 %v401, %v938
      %v940 = vand.u32 %v939, 4294901760
      %941 = vmatprep.subr.mxu0 %v940
      %v942 = vand.u32 %v400, 4294901760
      %v943 = vsub.f32 %v400, %v942
      %v944 = vand.u32 %v943, 4294901760
      %945 = vmatpush1.msra.mxu0 %v944
      %v946 = vand.u32 %v403, 4294901760
      %v947 = vsub.f32 %v403, %v946
      %v948 = vand.u32 %v947, 4294901760
      %949 = vmatprep.subr.mxu0 %v948
      %v950 = vand.u32 %v402, 4294901760
      %v951 = vsub.f32 %v402, %v950
      %v952 = vand.u32 %v951, 4294901760
      %953 = vmatpush1.msra.mxu0 %v952
      %v954 = vand.u32 %v405, 4294901760
      %v955 = vsub.f32 %v405, %v954
      %v956 = vand.u32 %v955, 4294901760
      %957 = vmatprep.subr.mxu0 %v956
      %v958 = vand.u32 %v404, 4294901760
      %v959 = vsub.f32 %v404, %v958
      %v960 = vand.u32 %v959, 4294901760
      %961 = vmatpush1.msra.mxu0 %v960
      %v962 = vand.u32 %v407, 4294901760
      %v963 = vsub.f32 %v407, %v962
      %v964 = vand.u32 %v963, 4294901760
      %965 = vmatprep.subr.mxu0 %v964
      %v966 = vand.u32 %v406, 4294901760
      %v967 = vsub.f32 %v406, %v966
      %v968 = vand.u32 %v967, 4294901760
      %969 = vmatpush1.msra.mxu0 %v968
      %v970 = vand.u32 %v409, 4294901760
      %v971 = vsub.f32 %v409, %v970
      %v972 = vand.u32 %v971, 4294901760
      %973 = vmatprep.subr.mxu0 %v972
      %v974 = vand.u32 %v408, 4294901760
      %v975 = vsub.f32 %v408, %v974
      %v976 = vand.u32 %v975, 4294901760
      %977 = vmatpush1.msra.mxu0 %v976
      %v978 = vand.u32 %v411, 4294901760
      %v979 = vsub.f32 %v411, %v978
      %v980 = vand.u32 %v979, 4294901760
      %981 = vmatprep.subr.mxu0 %v980
      %v982 = vand.u32 %v410, 4294901760
      %v983 = vsub.f32 %v410, %v982
      %v984 = vand.u32 %v983, 4294901760
      %985 = vmatpush1.msra.mxu0 %v984
      %v986 = vand.u32 %v413, 4294901760
      %v987 = vsub.f32 %v413, %v986
      %v988 = vand.u32 %v987, 4294901760
      %989 = vmatprep.subr.mxu0 %v988
      %v990 = vand.u32 %v412, 4294901760
      %v991 = vsub.f32 %v412, %v990
      %v992 = vand.u32 %v991, 4294901760
      %993 = vmatpush1.msra.mxu0 %v992
      %v994 = vand.u32 %v415, 4294901760
      %v995 = vsub.f32 %v415, %v994
      %v996 = vand.u32 %v995, 4294901760
      %997 = vmatprep.subr.mxu0 %v996
      %v998 = vand.u32 %v414, 4294901760
      %v999 = vsub.f32 %v414, %v998
      %v1000 = vand.u32 %v999, 4294901760
      %1001 = vmatpush1.msra.mxu0 %v1000
      %1002 = vmatprep.subr.mxu0 0.0
      %1003 = vmatpush1.msra.mxu0 0.0
      %1004 = vmatprep.subr.mxu0 0.0
      %1005 = vmatpush1.msra.mxu0 0.0
      %1006 = vmatprep.subr.mxu0 0.0
      %1007 = vmatpush1.msra.mxu0 0.0
      %1008 = vmatprep.subr.mxu0 0.0
      %1009 = vmatpush1.msra.mxu0 0.0
      %1010 = vmatprep.subr.mxu0 0.0
      %1011 = vmatpush1.msra.mxu0 0.0
      %1012 = vmatprep.subr.mxu0 0.0
      %1013 = vmatpush1.msra.mxu0 0.0
      %1014 = vmatprep.subr.mxu0 0.0
      %1015 = vmatpush1.msra.mxu0 0.0
      %1016 = vmatprep.subr.mxu0 0.0
      %1017 = vmatpush1.msra.mxu0 0.0
      %1018 = vmatprep.subr.mxu0 0.0
      %1019 = vmatpush1.msra.mxu0 0.0
      %1020 = vmatprep.subr.mxu0 0.0
      %1021 = vmatpush1.msra.mxu0 0.0
      %1022 = vmatprep.subr.mxu0 0.0
      %1023 = vmatpush1.msra.mxu0 0.0
      %1024 = vmatprep.subr.mxu0 0.0
      %1025 = vmatpush1.msra.mxu0 0.0
      %1026 = vmatprep.subr.mxu0 0.0
      %1027 = vmatpush1.msra.mxu0 0.0
      %1028 = vmatprep.subr.mxu0 0.0
      %1029 = vmatpush1.msra.mxu0 0.0
      %1030 = vmatprep.subr.mxu0 0.0
      %1031 = vmatpush1.msra.mxu0 0.0
      %1032 = vmatprep.subr.mxu0 0.0
      %1033 = vmatpush1.msra.mxu0 0.0
      %1034 = vmatprep.subr.mxu0 0.0
      %1035 = vmatpush1.msra.mxu0 0.0
      %1036 = vmatprep.subr.mxu0 0.0
      %1037 = vmatpush1.msra.mxu0 0.0
      %1038 = vmatprep.subr.mxu0 0.0
      %1039 = vmatpush1.msra.mxu0 0.0
      %1040 = vmatprep.subr.mxu0 0.0
      %1041 = vmatpush1.msra.mxu0 0.0
      %1042 = vmatprep.subr.mxu0 0.0
      %1043 = vmatpush1.msra.mxu0 0.0
      %1044 = vmatprep.subr.mxu0 0.0
      %1045 = vmatpush1.msra.mxu0 0.0
      %1046 = vmatprep.subr.mxu0 0.0
      %1047 = vmatpush1.msra.mxu0 0.0
      %1048 = vmatprep.subr.mxu0 0.0
      %1049 = vmatpush1.msra.mxu0 0.0
      %1050 = vmatprep.mubr.f32.mxu0 0.0
      %v1051 = vand.u32 %v421, 4294901760
      %1052 = vmatmul.mubr.f32.gmra.mrb[0].mxu0 %v1051
      %v1053 = vpop.f32.mrb[0].mxu0
      %v1054 = vadd.f32 %v916, %v1053
      %v1055 = vpop.f32.mrb[0].mxu0
      %v1056 = vadd.f32 %v918, %v1055
      %1057 = vmatprep.mubr.f32.mxu0 0.0
      %v1058 = vand.u32 %v424, 4294901760
      %1059 = vmatmul.mubr.f32.gmra.mrb[0].mxu0 %v1058
      %v1060 = vpop.f32.mrb[0].mxu0
      %v1061 = vadd.f32 %v925, %v1060
      %v1062 = vpop.f32.mrb[0].mxu0
      %v1063 = vadd.f32 %v927, %v1062
      %1064 = vmatprep.mubr.f32.mxu0 0.0
      %v1065 = vand.u32 %v427, 4294901760
      %1066 = vmatmul.mubr.f32.gmra.mrb[0].mxu0 %v1065
      %v1067 = vpop.f32.mrb[0].mxu0
      %v1068 = vadd.f32 %v934, %v1067
      %v1069 = vpop.f32.mrb[0].mxu0
      %v1070 = vadd.f32 %v936, %v1069
      %1071 = vdwg.mxu0
      %v1072 = vand.u32 %v401, 4294901760
      %1073 = vmatprep.subr.mxu0 %v1072
      %v1074 = vand.u32 %v400, 4294901760
      %1075 = vmatpush1.msra.mxu0 %v1074
      %v1076 = vand.u32 %v403, 4294901760
      %1077 = vmatprep.subr.mxu0 %v1076
      %v1078 = vand.u32 %v402, 4294901760
      %1079 = vmatpush1.msra.mxu0 %v1078
      %v1080 = vand.u32 %v405, 4294901760
      %1081 = vmatprep.subr.mxu0 %v1080
      %v1082 = vand.u32 %v404, 4294901760
      %1083 = vmatpush1.msra.mxu0 %v1082
      %v1084 = vand.u32 %v407, 4294901760
      %1085 = vmatprep.subr.mxu0 %v1084
      %v1086 = vand.u32 %v406, 4294901760
      %1087 = vmatpush1.msra.mxu0 %v1086
      %v1088 = vand.u32 %v409, 4294901760
      %1089 = vmatprep.subr.mxu0 %v1088
      %v1090 = vand.u32 %v408, 4294901760
      %1091 = vmatpush1.msra.mxu0 %v1090
      %v1092 = vand.u32 %v411, 4294901760
      %1093 = vmatprep.subr.mxu0 %v1092
      %v1094 = vand.u32 %v410, 4294901760
      %1095 = vmatpush1.msra.mxu0 %v1094
      %v1096 = vand.u32 %v413, 4294901760
      %1097 = vmatprep.subr.mxu0 %v1096
      %v1098 = vand.u32 %v412, 4294901760
      %1099 = vmatpush1.msra.mxu0 %v1098
      %v1100 = vand.u32 %v415, 4294901760
      %1101 = vmatprep.subr.mxu0 %v1100
      %v1102 = vand.u32 %v414, 4294901760
      %1103 = vmatpush1.msra.mxu0 %v1102
      %1104 = vmatprep.subr.mxu0 0.0
      %1105 = vmatpush1.msra.mxu0 0.0
      %1106 = vmatprep.subr.mxu0 0.0
      %1107 = vmatpush1.msra.mxu0 0.0
      %1108 = vmatprep.subr.mxu0 0.0
      %1109 = vmatpush1.msra.mxu0 0.0
      %1110 = vmatprep.subr.mxu0 0.0
      %1111 = vmatpush1.msra.mxu0 0.0
      %1112 = vmatprep.subr.mxu0 0.0
      %1113 = vmatpush1.msra.mxu0 0.0
      %1114 = vmatprep.subr.mxu0 0.0
      %1115 = vmatpush1.msra.mxu0 0.0
      %1116 = vmatprep.subr.mxu0 0.0
      %1117 = vmatpush1.msra.mxu0 0.0
      %1118 = vmatprep.subr.mxu0 0.0
      %1119 = vmatpush1.msra.mxu0 0.0
      %1120 = vmatprep.subr.mxu0 0.0
      %1121 = vmatpush1.msra.mxu0 0.0
      %1122 = vmatprep.subr.mxu0 0.0
      %1123 = vmatpush1.msra.mxu0 0.0
      %1124 = vmatprep.subr.mxu0 0.0
      %1125 = vmatpush1.msra.mxu0 0.0
      %1126 = vmatprep.subr.mxu0 0.0
      %1127 = vmatpush1.msra.mxu0 0.0
      %1128 = vmatprep.subr.mxu0 0.0
      %1129 = vmatpush1.msra.mxu0 0.0
      %1130 = vmatprep.subr.mxu0 0.0
      %1131 = vmatpush1.msra.mxu0 0.0
      %1132 = vmatprep.subr.mxu0 0.0
      %1133 = vmatpush1.msra.mxu0 0.0
      %1134 = vmatprep.subr.mxu0 0.0
      %1135 = vmatpush1.msra.mxu0 0.0
      %1136 = vmatprep.subr.mxu0 0.0
      %1137 = vmatpush1.msra.mxu0 0.0
      %1138 = vmatprep.subr.mxu0 0.0
      %1139 = vmatpush1.msra.mxu0 0.0
      %1140 = vmatprep.subr.mxu0 0.0
      %1141 = vmatpush1.msra.mxu0 0.0
      %1142 = vmatprep.subr.mxu0 0.0
      %1143 = vmatpush1.msra.mxu0 0.0
      %1144 = vmatprep.subr.mxu0 0.0
      %1145 = vmatpush1.msra.mxu0 0.0
      %1146 = vmatprep.subr.mxu0 0.0
      %1147 = vmatpush1.msra.mxu0 0.0
      %1148 = vmatprep.subr.mxu0 0.0
      %1149 = vmatpush1.msra.mxu0 0.0
      %1150 = vmatprep.subr.mxu0 0.0
      %1151 = vmatpush1.msra.mxu0 0.0
      %1152 = vmatprep.mubr.f32.mxu0 0.0
      %v1153 = vand.u32 %v421, 4294901760
      %1154 = vmatmul.mubr.f32.gmra.mrb[0].mxu0 %v1153
      %v1155 = vpop.f32.mrb[0].mxu0
      %v1156 = vadd.f32 %v1054, %v1155
      %v1157 = vpop.f32.mrb[0].mxu0
      %v1158 = vadd.f32 %v1056, %v1157
      %1159 = vmatprep.mubr.f32.mxu0 0.0
      %v1160 = vand.u32 %v424, 4294901760
      %1161 = vmatmul.mubr.f32.gmra.mrb[0].mxu0 %v1160
      %v1162 = vpop.f32.mrb[0].mxu0
      %v1163 = vadd.f32 %v1061, %v1162
      %v1164 = vpop.f32.mrb[0].mxu0
      %v1165 = vadd.f32 %v1063, %v1164
      %1166 = vmatprep.mubr.f32.mxu0 0.0
      %v1167 = vand.u32 %v427, 4294901760
      %1168 = vmatmul.mubr.f32.gmra.mrb[0].mxu0 %v1167
      %v1169 = vpop.f32.mrb[0].mxu0
      %v1170 = vadd.f32 %v1068, %v1169
      %v1171 = vpop.f32.mrb[0].mxu0
      %v1172 = vadd.f32 %v1070, %v1171
      %1173 = vdwg.mxu0
      %v1174 = vmul.f32 %v1156, %v266
      %v1175 = vmul.f32 %v1158, %v267
      %v1176 = vmul.f32 %v1163, %v266
      %v1177 = vmul.f32 %v1165, %v267
      %v1178 = vmul.f32 %v1170, %v266
      %v1179 = vmul.f32 %v1172, %v267
      %v1180 = vrot.slane %v1174, 4
      %v1181 = vadd.f32 %v1174, %v1180
      %v1182 = vrot.slane %v1181, 2
      %v1183 = vadd.f32 %v1181, %v1182
      %v1184 = vrot.slane %v1183, 1
      %v1185 = vadd.f32 %v1183, %v1184
      %v1186 = vrot.slane %v1175, 4
      %v1187 = vadd.f32 %v1175, %v1186
      %v1188 = vrot.slane %v1187, 2
      %v1189 = vadd.f32 %v1187, %v1188
      %v1190 = vrot.slane %v1189, 1
      %v1191 = vadd.f32 %v1189, %v1190
      %v1192 = vrot.slane %v1176, 4
      %v1193 = vadd.f32 %v1176, %v1192
      %v1194 = vrot.slane %v1193, 2
      %v1195 = vadd.f32 %v1193, %v1194
      %v1196 = vrot.slane %v1195, 1
      %v1197 = vadd.f32 %v1195, %v1196
      %v1198 = vrot.slane %v1177, 4
      %v1199 = vadd.f32 %v1177, %v1198
      %v1200 = vrot.slane %v1199, 2
      %v1201 = vadd.f32 %v1199, %v1200
      %v1202 = vrot.slane %v1201, 1
      %v1203 = vadd.f32 %v1201, %v1202
      %v1204 = vrot.slane %v1178, 4
      %v1205 = vadd.f32 %v1178, %v1204
      %v1206 = vrot.slane %v1205, 2
      %v1207 = vadd.f32 %v1205, %v1206
      %v1208 = vrot.slane %v1207, 1
      %v1209 = vadd.f32 %v1207, %v1208
      %v1210 = vrot.slane %v1179, 4
      %v1211 = vadd.f32 %v1179, %v1210
      %v1212 = vrot.slane %v1211, 2
      %v1213 = vadd.f32 %v1211, %v1212
      %v1214 = vrot.slane %v1213, 1
      %v1215 = vadd.f32 %v1213, %v1214
      %v1222 = vcombine.low %v1185, %v1191
      %v1223 = vcombine.low %v1197, %v1203
      %v1224 = vcombine.low %v1209, %v1215
      %v1225 = vrot.slane %v1223, 7
      %vm1226 = vcmask 1041409
      %v1227 = vsel %vm1226, %v1225, %v1222
      %vm1228 = vcmask 1045509
      %v1229 = vsel %vm1228, %v1225, %v1227
      %v1230 = vrot.slane %v1224, 6
      %vm1231 = vcmask 1042434
      %v1232 = vsel %vm1231, %v1230, %v1229
      %vm1233 = vcmask 1046534
      %v1234 = vsel %vm1233, %v1230, %v1232
      %1236 = vst [vmem:[%s198] sm:$0x77] %v1234
      %s1237 = smul.u32 2, %s20
      %p1238 = scmp.lt.s32.totalorder %s19, 1
      %s1239 = scalar_select %p1238, %s19, 1
      %p1240 = scmp.lt.s32.totalorder %s18, 0
      %s1241 = scalar_select %p1240, %s18, 0
      %p1242 = scmp.lt.s32.totalorder %s1237, 1
      %s1243 = scalar_select %p1242, %s1237, 1
      %s1244 = smul.addr %s1241, 2
      %s1245 = sadd.s32 %s1243, %s1244
      %s1246 = smul.addr %s1239, 2
      %s1247 = sadd.s32 %s1245, %s1246
      %s1248 = smul.addr %s1247, 4
      %s1249 = scalar_lea.vmem %s2, %s1248
      // Predicated region
      $region29: #{tpu_custom_call.1} parent=27 // pred_check
        %p1250 = pneg %p103
      $region30: #{tpu_custom_call.1} parent=27 // pred_check_branch
        %1252 = sbr.rel (%p1250) target = $region32
      $region31: #{tpu_custom_call.1} parent=27 // pred_region
        %s1253 = smul.u32 2, %s20
      $region32: #{tpu_custom_call.1} parent=27 // pred_fallthru
        _
    $region28: #{tpu_custom_call.1} parent=5 // pred_fallthru
      _
    %p1254 = scmp.le.s32.totalorder 2, %s8
    // Predicated region
    $region33: #{tpu_custom_call.1} parent=5 // pred_check
      %p1255 = pneg %p1254
    $region34: #{tpu_custom_call.1} parent=5 // pred_check_branch
      %1257 = sbr.rel (%p1255) target = $region36
    $region35: #{tpu_custom_call.1} parent=5 // pred_region
      %s1258 = ssub.s32 %s8, 2
      // Predicated region
      $region37: #{tpu_custom_call.1} parent=35 // pred_check
        %p1259 = pneg %p109
      $region38: #{tpu_custom_call.1} parent=35 // pred_check_branch
        %1261 = sbr.rel (%p1259) target = $region40
      $region39: #{tpu_custom_call.1} parent=35 // pred_region
        %s1262 = smul.u32 2, %s23
        %p1263 = scmp.lt.s32.totalorder %s22, 1
        %s1264 = scalar_select %p1263, %s22, 1
        %p1265 = scmp.lt.s32.totalorder %s21, 0
        %s1266 = scalar_select %p1265, %s21, 0
        %p1267 = scmp.lt.s32.totalorder %s1262, 1
        %s1268 = scalar_select %p1267, %s1262, 1
        %s1269 = smul.addr %s1266, 2
        %s1270 = sadd.s32 %s1268, %s1269
        %s1271 = smul.addr %s1264, 2
        %s1272 = sadd.s32 %s1270, %s1271
        %s1273 = smul.addr %s1272, 4
        %s1274 = scalar_lea.vmem %s2, %s1273
      $region40: #{tpu_custom_call.1} parent=35 // pred_fallthru
        _
    $region36: #{tpu_custom_call.1} parent=5 // pred_fallthru
      _
  $region6: #{tpu_custom_call.1} parent=0 // loop_footer
    %s12 = sadd.s32 1, %s8
  $region7: #{tpu_custom_call.1} parent=0 // loop_footer_branch
    %7 = sbr.rel target = $region3
  $region8: #{tpu_custom_call.1} parent=0 // loop_exit
    _

</llo_original>
